<compile_context>
chip_gen: v5e
topology: v5e:2x2
jax: 0.10.0
libtpu: 0.0.40
codegen_flags: <defaults>
</compile_context>

<pallas_src>
import functools

import jax
import jax.numpy as jnp
from jax import lax
from jax.experimental import pallas as pl
from jax.experimental.pallas import tpu as pltpu

# Problem sizes (from RNN_MTL.__init__, defaults)
N_INPUT = 6
N_OUTPUT = 8
N_NODES = 20
INIT_STD_SCALE = 0.1

P = 128                        # lane padding
BIAS_LANE = N_NODES + N_INPUT  # lane 26: constant 1.0 -> folds (b_in+b_fb) into w_rec
HEAD_T = 8                     # timesteps per hoisted-head sub-block (HEAD_T*b_blk MXU rows)
DEFAULT_B_BLK = 8              # sublane batch block (per grid step / per TensorCore)
DEFAULT_T_CHUNK = 32           # timesteps per grid step along the sequential axis


def rnn_mtl_seq_kernel(inp_ref, state0_ref, w_rec_ref, w_out_ref, b_out_ref,
                       packed_ref, state_ref):
    t_chunk, b_blk, _ = inp_ref.shape

    # Initialise the VMEM-resident recurrent carry on the first T-chunk of
    # each batch group (chunk axis is the last, "arbitrary" grid axis).
    @pl.when(pl.program_id(1) == 0)
    def _():
        state_ref[...] = state0_ref[...]

    w_rec = w_rec_ref[...]                     # loop-invariant (rows: w_fb.T / w_in.T / bias)

    # ---- Serial part: only the recurrence sits on the per-step chain. ----
    def step(t, state):
        # state lanes 0..19, input lanes 20..25, bias-one lane 26 -> lane-concat by add.
        x = inp_ref[t] + state
        new_state = jnp.tanh(jnp.dot(x, w_rec, preferred_element_type=jnp.float32))
        packed_ref[t] = new_state              # lanes 20..127 are exactly 0
        return new_state

    state_ref[...] = lax.fori_loop(0, t_chunk, step, state_ref[...], unroll=8)

    # ---- Hoisted output head: batched over HEAD_T timesteps per MXU push. ----
    w_out = w_out_ref[...]                     # rows 0..19, cols 20..27 = w_out.T (shifted)
    rows = HEAD_T * b_blk
    b_out = jnp.broadcast_to(b_out_ref[...], (rows, P))     # lanes 20..27 = b_out
    lane = lax.broadcasted_iota(jnp.int32, (rows, P), 1)
    pred_mask = jnp.logical_and(lane >= N_NODES, lane < N_NODES + N_INPUT)          # 20..25
    spec_mask = jnp.logical_and(lane >= N_NODES + N_INPUT, lane < N_NODES + N_OUTPUT)  # 26..27
    any_mask = jnp.logical_or(pred_mask, spec_mask)

    @pl.loop(0, t_chunk // HEAD_T)
    def _(s):
        t0 = pl.multiple_of(s * HEAD_T, HEAD_T)
        st = packed_ref[pl.ds(t0, HEAD_T)]                    # (HEAD_T, b_blk, P) states
        flat = st.reshape(rows, P)
        lin = jnp.dot(flat, w_out, preferred_element_type=jnp.float32) + b_out
        # relu only on the spec lanes, then a single masked exp pass.
        z = jnp.where(spec_mask, jnp.maximum(lin, 0.0), lin)
        m_pred = jnp.max(jnp.where(pred_mask, z, -jnp.inf), axis=-1, keepdims=True)
        m_spec = jnp.max(jnp.where(spec_mask, z, -jnp.inf), axis=-1, keepdims=True)
        e = jnp.where(any_mask, jnp.exp(z - jnp.where(pred_mask, m_pred, m_spec)), 0.0)
        s_pred = jnp.sum(jnp.where(pred_mask, e, 0.0), axis=-1, keepdims=True)
        s_all = jnp.sum(e, axis=-1, keepdims=True)
        denom = jnp.where(pred_mask, s_pred, s_all - s_pred)  # >= 1 on both heads
        probs = e / denom                                     # 0 outside lanes 20..27
        # Pack: lanes 0..19 keep the state, lanes 20..27 get the probabilities.
        packed_ref[pl.ds(t0, HEAD_T)] = (flat + probs).reshape(HEAD_T, b_blk, P)


def prepare_params(params):
    """Pre-pad / transpose / fuse the torch-layout weights ONCE (outside the hot path)."""
    w_in, b_in, w_fb, b_fb, w_out, b_out = params            # torch layout (out, in), (out,)
    w_rec = jnp.zeros((P, P), jnp.float32)
    w_rec = w_rec.at[:N_NODES, :N_NODES].set(w_fb.T.astype(jnp.float32))
    w_rec = w_rec.at[N_NODES:N_NODES + N_INPUT, :N_NODES].set(w_in.T.astype(jnp.float32))
    w_rec = w_rec.at[BIAS_LANE, :N_NODES].set((b_in + b_fb).astype(jnp.float32))
    # Output head columns shifted by N_NODES so probs land in lanes 20..27 of the packed output.
    w_out_p = jnp.zeros((P, P), jnp.float32).at[:N_NODES, N_NODES:N_NODES + N_OUTPUT].set(
        w_out.T.astype(jnp.float32))
    b_out_p = jnp.zeros((1, P), jnp.float32).at[0, N_NODES:N_NODES + N_OUTPUT].set(
        b_out.astype(jnp.float32))
    return w_rec, w_out_p, b_out_p


def _round_up(x, m):
    return ((x + m - 1) // m) * m


@functools.partial(jax.jit, static_argnames=("t_chunk", "b_blk"))
def rnn_mtl_rollout(inp_seq, state0, prepared, *, t_chunk=DEFAULT_T_CHUNK,
                    b_blk=DEFAULT_B_BLK):
    """inp_seq: (T, B, 6), state0: (B, 20). Returns (states (T,B,20), outputs (T,B,8))."""
    assert b_blk % 8 == 0, "batch block must be a multiple of the sublane width"
    w_rec, w_out_p, b_out_p = prepared
    T, B, _ = inp_seq.shape

    T_pad0 = _round_up(T, HEAD_T)
    tc = min(_round_up(t_chunk, HEAD_T), T_pad0)
    T_pad = _round_up(T_pad0, tc)
    B_pad = _round_up(B, b_blk)
    n_groups = B_pad // b_blk
    n_chunks = T_pad // tc

    # Step inputs in lanes 20..25; constant 1.0 in lane 26 (bias fold);
    # initial state in lanes 0..19.
    inp_p = jnp.zeros((T_pad, B_pad, P), jnp.float32)
    inp_p = inp_p.at[:T, :B, N_NODES:N_NODES + N_INPUT].set(inp_seq.astype(jnp.float32))
    inp_p = inp_p.at[:, :, BIAS_LANE].set(1.0)
    st0_p = jnp.zeros((B_pad, P), jnp.float32)
    st0_p = st0_p.at[:B, :N_NODES].set(state0.astype(jnp.float32))

    block_bytes = tc * b_blk * P * 4
    vmem_limit = int(min(64 << 20, max(32 << 20, 8 * block_bytes)))

    packed = pl.pallas_call(
        rnn_mtl_seq_kernel,
        out_shape=jax.ShapeDtypeStruct((T_pad, B_pad, P), jnp.float32),
        grid_spec=pltpu.PrefetchScalarGridSpec(
            num_scalar_prefetch=0,
            grid=(n_groups, n_chunks),                        # (parallel batch, sequential T)
            in_specs=[
                pl.BlockSpec((tc, b_blk, P), lambda g, c: (c, g, 0)),   # inp chunk
                pl.BlockSpec((b_blk, P), lambda g, c: (g, 0)),          # initial state
                pl.BlockSpec((P, P), lambda g, c: (0, 0)),              # fused recurrent weight
                pl.BlockSpec((P, P), lambda g, c: (0, 0)),              # output weight (shifted)
                pl.BlockSpec((1, P), lambda g, c: (0, 0)),              # output bias
            ],
            out_specs=pl.BlockSpec((tc, b_blk, P), lambda g, c: (c, g, 0)),
            scratch_shapes=[pltpu.VMEM((b_blk, P), jnp.float32)],       # carried state
        ),
        compiler_params=pltpu.CompilerParams(
            dimension_semantics=("parallel", "arbitrary"),
            vmem_limit_bytes=vmem_limit),
    )(inp_p, st0_p, w_rec, w_out_p, b_out_p)

    states = packed[:T, :B, :N_NODES]
    outputs = packed[:T, :B, N_NODES:N_NODES + N_OUTPUT]
    return states, outputs


def rnn_mtl_forward(inp, rnn_state, prepared):
    """Single-step forward matching RNN_MTL.forward: inp (6,), state (20,)."""
    states, outputs = rnn_mtl_rollout(inp[None, None, :], rnn_state[None, :], prepared)
    return states[0, 0], outputs[0, 0]


def init_params(key):
    """Deterministic synthetic init (shapes match the three nn.Linear layers)."""
    ks = jax.random.split(key, 6)
    w_in = jax.random.normal(ks[0], (N_NODES, N_INPUT), jnp.float32) * 0.3
    b_in = jax.random.normal(ks[1], (N_NODES,), jnp.float32) * 0.1
    # Contractive recurrence (spectral norm < 1) so fp reorder noise stays bounded.
    w_fb = jax.random.normal(ks[2], (N_NODES, N_NODES), jnp.float32) * 0.08
    b_fb = jax.random.normal(ks[3], (N_NODES,), jnp.float32) * 0.1
    w_out = jax.random.normal(ks[4], (N_OUTPUT, N_NODES), jnp.float32) * 0.3
    b_out = jax.random.normal(ks[5], (N_OUTPUT,), jnp.float32) * 0.1
    return (w_in, b_in, w_fb, b_fb, w_out, b_out)


def reference_rollout(inp_seq, state0, params):
    """Pure-JAX reference: apply the PyTorch forward T times (scan)."""
    w_in, b_in, w_fb, b_fb, w_out, b_out = params

    def step(state, inp):
        lin_comb = inp @ w_in.T + b_in + state @ w_fb.T + b_fb
        new_state = jnp.tanh(lin_comb)
        lin_out = new_state @ w_out.T + b_out
        out_pred = jax.nn.softmax(lin_out[..., :N_INPUT], axis=-1)
        out_spec = jax.nn.softmax(jnp.maximum(lin_out[..., N_INPUT:], 0.0), axis=-1)
        out = jnp.concatenate([out_pred, out_spec], axis=-1)
        return new_state, (new_state, out)

    _, (states, outputs) = lax.scan(step, state0, inp_seq)
    return states, outputs


if __name__ == "__main__":
    key = jax.random.PRNGKey(0)
    k_param, k_state, k_inp, k_state2, k_inp2 = jax.random.split(key, 5)

    params = init_params(k_param)
    prepared = prepare_params(params)   # one-time padding / transposition / bias fusion

    # Small case (module-scale shapes): B=2 sequences, T=8 steps.
    B, T = 2, 8
    state0 = jax.random.normal(k_state, (B, N_NODES), jnp.float32) * INIT_STD_SCALE
    inp_seq = jax.random.normal(k_inp, (T, B, N_INPUT), jnp.float32)

    states, outputs = rnn_mtl_rollout(inp_seq, state0, prepared)
    states = jax.block_until_ready(states)
    outputs = jax.block_until_ready(outputs)

    ref_states, ref_outputs = reference_rollout(inp_seq, state0, params)
    assert states.shape == (T, B, N_NODES) and outputs.shape == (T, B, N_OUTPUT)
    assert jnp.allclose(states, ref_states, atol=1e-4, rtol=1e-4), "state mismatch"
    assert jnp.allclose(outputs, ref_outputs, atol=2e-3, rtol=2e-3), "output mismatch"

    # Larger case: exercises T-chunking (sequential grid axis with VMEM-carried
    # state) and multiple batch groups (parallel axis -> both TCs on v7x).
    B2, T2 = 16, 48
    state02 = jax.random.normal(k_state2, (B2, N_NODES), jnp.float32) * INIT_STD_SCALE
    inp_seq2 = jax.random.normal(k_inp2, (T2, B2, N_INPUT), jnp.float32)
    states2, outputs2 = rnn_mtl_rollout(inp_seq2, state02, prepared, t_chunk=16)
    states2 = jax.block_until_ready(states2)
    outputs2 = jax.block_until_ready(outputs2)
    ref_states2, ref_outputs2 = reference_rollout(inp_seq2, state02, params)
    assert jnp.allclose(states2, ref_states2, atol=1e-4, rtol=1e-4), "chunked state mismatch"
    assert jnp.allclose(outputs2, ref_outputs2, atol=2e-3, rtol=2e-3), "chunked output mismatch"

    # Single-step parity with RNN_MTL.forward.
    s1, o1 = rnn_mtl_forward(inp_seq[0, 0], state0[0], prepared)
    s1 = jax.block_until_ready(s1)
    o1 = jax.block_until_ready(o1)
    assert jnp.allclose(s1, ref_states[0, 0], atol=1e-4, rtol=1e-4), "step state mismatch"
    assert jnp.allclose(o1, ref_outputs[0, 0], atol=2e-3, rtol=2e-3), "step output mismatch"

    # TODO(synk): save_model / git / pickle bookkeeping of RNN_MTL has no kernel equivalent.
    print("KERNEL_OK")
</pallas_src>

<mosaic_0001>
module attributes {stable_mosaic.version = 11 : i64} {
  func.func @rnn_mtl_seq_kernel(%arg0: i32, %arg1: i32, %arg2: memref<8x8x128xf32, #tpu.memory_space<vmem>>, %arg3: memref<8x128xf32, #tpu.memory_space<vmem>>, %arg4: memref<128x128xf32, #tpu.memory_space<vmem>>, %arg5: memref<128x128xf32, #tpu.memory_space<vmem>>, %arg6: memref<1x128xf32, #tpu.memory_space<vmem>>, %arg7: memref<8x8x128xf32, #tpu.memory_space<vmem>>, %arg8: memref<8x128xf32, #tpu.memory_space<vmem>>) attributes {dimension_semantics = [#tpu.dimension_semantics<parallel>, #tpu.dimension_semantics<arbitrary>], iteration_bounds = array<i64: 1, 1>, scalar_prefetch = 0 : i64, scratch_operands = 1 : i64, tpu.core_type = #tpu.core_type<tc>, window_params = [{transform_indices = @transform_0, window_bounds = array<i64: 8, 8, 128>}, {transform_indices = @transform_1, window_bounds = array<i64: 8, 128>}, {pipeline_mode = #tpu.pipeline_mode<synchronous>, transform_indices = @transform_2, window_bounds = array<i64: 128, 128>}, {pipeline_mode = #tpu.pipeline_mode<synchronous>, transform_indices = @transform_3, window_bounds = array<i64: 128, 128>}, {pipeline_mode = #tpu.pipeline_mode<synchronous>, transform_indices = @transform_4, window_bounds = array<i64: 1, 128>}, {transform_indices = @transform_5, window_bounds = array<i64: 8, 8, 128>}]} {
    %c0_i32 = arith.constant 0 : i32
    %0 = arith.cmpi eq, %arg1, %c0_i32 : i32
    %1 = arith.extui %0 : i1 to i32
    %c0_i32_0 = arith.constant 0 : i32
    %2 = arith.cmpi ne, %1, %c0_i32_0 : i32
    scf.if %2 {
      %c0_70 = arith.constant 0 : index
      %c0_71 = arith.constant 0 : index
      %148 = vector.load %arg3[%c0_70, %c0_71] : memref<8x128xf32, #tpu.memory_space<vmem>>, vector<8x128xf32>
      %c0_72 = arith.constant 0 : index
      %c0_73 = arith.constant 0 : index
      %149 = vector.load %arg8[%c0_72, %c0_73] : memref<8x128xf32, #tpu.memory_space<vmem>>, vector<8x128xf32>
      tpu.vector_store %arg8[%c0_72, %c0_73], %148 {strides = array<i32>} : memref<8x128xf32, #tpu.memory_space<vmem>>, vector<8x128xf32>,
    } else {
    }
    %c0 = arith.constant 0 : index
    %c0_1 = arith.constant 0 : index
    %3 = vector.load %arg4[%c0, %c0_1] : memref<128x128xf32, #tpu.memory_space<vmem>>, vector<128x128xf32>
    %c0_2 = arith.constant 0 : index
    %c0_3 = arith.constant 0 : index
    %4 = vector.load %arg8[%c0_2, %c0_3] : memref<8x128xf32, #tpu.memory_space<vmem>>, vector<8x128xf32>
    %c0_i32_4 = arith.constant 0 : i32
    %5 = arith.index_cast %c0_i32_4 : i32 to index
    %c0_5 = arith.constant 0 : index
    %c0_6 = arith.constant 0 : index
    %6 = vector.load %arg2[%5, %c0_5, %c0_6] : memref<8x8x128xf32, #tpu.memory_space<vmem>>, vector<1x8x128xf32>
    %7 = vector.shape_cast %6 : vector<1x8x128xf32> to vector<8x128xf32>
    %8 = arith.addf %7, %4 : vector<8x128xf32>
    %cst = arith.constant dense<0.000000e+00> : vector<8x128xf32>
    %9 = tpu.matmul %8, %3, %cst {dimension_numbers = #tpu.dot_dimension_numbers<[1], [0], [0], [1], [0, 0, 1, 1], [], []>} : vector<8x128xf32>, vector<128x128xf32>, vector<8x128xf32> -> vector<8x128xf32>
    %10 = math.tanh %9 : vector<8x128xf32>
    %11 = arith.index_cast %c0_i32_4 : i32 to index
    %c0_7 = arith.constant 0 : index
    %c0_8 = arith.constant 0 : index
    %12 = vector.load %arg7[%11, %c0_7, %c0_8] : memref<8x8x128xf32, #tpu.memory_space<vmem>>, vector<1x8x128xf32>
    %13 = vector.shape_cast %12 : vector<1x8x128xf32> to vector<8x128xf32>
    %14 = vector.shape_cast %10 : vector<8x128xf32> to vector<1x8x128xf32>
    tpu.vector_store %arg7[%11, %c0_7, %c0_8], %14 {strides = array<i32>} : memref<8x8x128xf32, #tpu.memory_space<vmem>>, vector<1x8x128xf32>,
    %c1_i32 = arith.constant 1 : i32
    %15 = arith.index_cast %c1_i32 : i32 to index
    %c0_9 = arith.constant 0 : index
    %c0_10 = arith.constant 0 : index
    %16 = vector.load %arg2[%15, %c0_9, %c0_10] : memref<8x8x128xf32, #tpu.memory_space<vmem>>, vector<1x8x128xf32>
    %17 = vector.shape_cast %16 : vector<1x8x128xf32> to vector<8x128xf32>
    %18 = arith.addf %17, %10 : vector<8x128xf32>
    %cst_11 = arith.constant dense<0.000000e+00> : vector<8x128xf32>
    %19 = tpu.matmul %18, %3, %cst_11 {dimension_numbers = #tpu.dot_dimension_numbers<[1], [0], [0], [1], [0, 0, 1, 1], [], []>} : vector<8x128xf32>, vector<128x128xf32>, vector<8x128xf32> -> vector<8x128xf32>
    %20 = math.tanh %19 : vector<8x128xf32>
    %21 = arith.index_cast %c1_i32 : i32 to index
    %c0_12 = arith.constant 0 : index
    %c0_13 = arith.constant 0 : index
    %22 = vector.load %arg7[%21, %c0_12, %c0_13] : memref<8x8x128xf32, #tpu.memory_space<vmem>>, vector<1x8x128xf32>
    %23 = vector.shape_cast %22 : vector<1x8x128xf32> to vector<8x128xf32>
    %24 = vector.shape_cast %20 : vector<8x128xf32> to vector<1x8x128xf32>
    tpu.vector_store %arg7[%21, %c0_12, %c0_13], %24 {strides = array<i32>} : memref<8x8x128xf32, #tpu.memory_space<vmem>>, vector<1x8x128xf32>,
    %c2_i32 = arith.constant 2 : i32
    %25 = arith.index_cast %c2_i32 : i32 to index
    %c0_14 = arith.constant 0 : index
    %c0_15 = arith.constant 0 : index
    %26 = vector.load %arg2[%25, %c0_14, %c0_15] : memref<8x8x128xf32, #tpu.memory_space<vmem>>, vector<1x8x128xf32>
    %27 = vector.shape_cast %26 : vector<1x8x128xf32> to vector<8x128xf32>
    %28 = arith.addf %27, %20 : vector<8x128xf32>
    %cst_16 = arith.constant dense<0.000000e+00> : vector<8x128xf32>
    %29 = tpu.matmul %28, %3, %cst_16 {dimension_numbers = #tpu.dot_dimension_numbers<[1], [0], [0], [1], [0, 0, 1, 1], [], []>} : vector<8x128xf32>, vector<128x128xf32>, vector<8x128xf32> -> vector<8x128xf32>
    %30 = math.tanh %29 : vector<8x128xf32>
    %31 = arith.index_cast %c2_i32 : i32 to index
    %c0_17 = arith.constant 0 : index
    %c0_18 = arith.constant 0 : index
    %32 = vector.load %arg7[%31, %c0_17, %c0_18] : memref<8x8x128xf32, #tpu.memory_space<vmem>>, vector<1x8x128xf32>
    %33 = vector.shape_cast %32 : vector<1x8x128xf32> to vector<8x128xf32>
    %34 = vector.shape_cast %30 : vector<8x128xf32> to vector<1x8x128xf32>
    tpu.vector_store %arg7[%31, %c0_17, %c0_18], %34 {strides = array<i32>} : memref<8x8x128xf32, #tpu.memory_space<vmem>>, vector<1x8x128xf32>,
    %c3_i32 = arith.constant 3 : i32
    %35 = arith.index_cast %c3_i32 : i32 to index
    %c0_19 = arith.constant 0 : index
    %c0_20 = arith.constant 0 : index
    %36 = vector.load %arg2[%35, %c0_19, %c0_20] : memref<8x8x128xf32, #tpu.memory_space<vmem>>, vector<1x8x128xf32>
    %37 = vector.shape_cast %36 : vector<1x8x128xf32> to vector<8x128xf32>
    %38 = arith.addf %37, %30 : vector<8x128xf32>
    %cst_21 = arith.constant dense<0.000000e+00> : vector<8x128xf32>
    %39 = tpu.matmul %38, %3, %cst_21 {dimension_numbers = #tpu.dot_dimension_numbers<[1], [0], [0], [1], [0, 0, 1, 1], [], []>} : vector<8x128xf32>, vector<128x128xf32>, vector<8x128xf32> -> vector<8x128xf32>
    %40 = math.tanh %39 : vector<8x128xf32>
    %41 = arith.index_cast %c3_i32 : i32 to index
    %c0_22 = arith.constant 0 : index
    %c0_23 = arith.constant 0 : index
    %42 = vector.load %arg7[%41, %c0_22, %c0_23] : memref<8x8x128xf32, #tpu.memory_space<vmem>>, vector<1x8x128xf32>
    %43 = vector.shape_cast %42 : vector<1x8x128xf32> to vector<8x128xf32>
    %44 = vector.shape_cast %40 : vector<8x128xf32> to vector<1x8x128xf32>
    tpu.vector_store %arg7[%41, %c0_22, %c0_23], %44 {strides = array<i32>} : memref<8x8x128xf32, #tpu.memory_space<vmem>>, vector<1x8x128xf32>,
    %c4_i32 = arith.constant 4 : i32
    %45 = arith.index_cast %c4_i32 : i32 to index
    %c0_24 = arith.constant 0 : index
    %c0_25 = arith.constant 0 : index
    %46 = vector.load %arg2[%45, %c0_24, %c0_25] : memref<8x8x128xf32, #tpu.memory_space<vmem>>, vector<1x8x128xf32>
    %47 = vector.shape_cast %46 : vector<1x8x128xf32> to vector<8x128xf32>
    %48 = arith.addf %47, %40 : vector<8x128xf32>
    %cst_26 = arith.constant dense<0.000000e+00> : vector<8x128xf32>
    %49 = tpu.matmul %48, %3, %cst_26 {dimension_numbers = #tpu.dot_dimension_numbers<[1], [0], [0], [1], [0, 0, 1, 1], [], []>} : vector<8x128xf32>, vector<128x128xf32>, vector<8x128xf32> -> vector<8x128xf32>
    %50 = math.tanh %49 : vector<8x128xf32>
    %51 = arith.index_cast %c4_i32 : i32 to index
    %c0_27 = arith.constant 0 : index
    %c0_28 = arith.constant 0 : index
    %52 = vector.load %arg7[%51, %c0_27, %c0_28] : memref<8x8x128xf32, #tpu.memory_space<vmem>>, vector<1x8x128xf32>
    %53 = vector.shape_cast %52 : vector<1x8x128xf32> to vector<8x128xf32>
    %54 = vector.shape_cast %50 : vector<8x128xf32> to vector<1x8x128xf32>
    tpu.vector_store %arg7[%51, %c0_27, %c0_28], %54 {strides = array<i32>} : memref<8x8x128xf32, #tpu.memory_space<vmem>>, vector<1x8x128xf32>,
    %c5_i32 = arith.constant 5 : i32
    %55 = arith.index_cast %c5_i32 : i32 to index
    %c0_29 = arith.constant 0 : index
    %c0_30 = arith.constant 0 : index
    %56 = vector.load %arg2[%55, %c0_29, %c0_30] : memref<8x8x128xf32, #tpu.memory_space<vmem>>, vector<1x8x128xf32>
    %57 = vector.shape_cast %56 : vector<1x8x128xf32> to vector<8x128xf32>
    %58 = arith.addf %57, %50 : vector<8x128xf32>
    %cst_31 = arith.constant dense<0.000000e+00> : vector<8x128xf32>
    %59 = tpu.matmul %58, %3, %cst_31 {dimension_numbers = #tpu.dot_dimension_numbers<[1], [0], [0], [1], [0, 0, 1, 1], [], []>} : vector<8x128xf32>, vector<128x128xf32>, vector<8x128xf32> -> vector<8x128xf32>
    %60 = math.tanh %59 : vector<8x128xf32>
    %61 = arith.index_cast %c5_i32 : i32 to index
    %c0_32 = arith.constant 0 : index
    %c0_33 = arith.constant 0 : index
    %62 = vector.load %arg7[%61, %c0_32, %c0_33] : memref<8x8x128xf32, #tpu.memory_space<vmem>>, vector<1x8x128xf32>
    %63 = vector.shape_cast %62 : vector<1x8x128xf32> to vector<8x128xf32>
    %64 = vector.shape_cast %60 : vector<8x128xf32> to vector<1x8x128xf32>
    tpu.vector_store %arg7[%61, %c0_32, %c0_33], %64 {strides = array<i32>} : memref<8x8x128xf32, #tpu.memory_space<vmem>>, vector<1x8x128xf32>,
    %c6_i32 = arith.constant 6 : i32
    %65 = arith.index_cast %c6_i32 : i32 to index
    %c0_34 = arith.constant 0 : index
    %c0_35 = arith.constant 0 : index
    %66 = vector.load %arg2[%65, %c0_34, %c0_35] : memref<8x8x128xf32, #tpu.memory_space<vmem>>, vector<1x8x128xf32>
    %67 = vector.shape_cast %66 : vector<1x8x128xf32> to vector<8x128xf32>
    %68 = arith.addf %67, %60 : vector<8x128xf32>
    %cst_36 = arith.constant dense<0.000000e+00> : vector<8x128xf32>
    %69 = tpu.matmul %68, %3, %cst_36 {dimension_numbers = #tpu.dot_dimension_numbers<[1], [0], [0], [1], [0, 0, 1, 1], [], []>} : vector<8x128xf32>, vector<128x128xf32>, vector<8x128xf32> -> vector<8x128xf32>
    %70 = math.tanh %69 : vector<8x128xf32>
    %71 = arith.index_cast %c6_i32 : i32 to index
    %c0_37 = arith.constant 0 : index
    %c0_38 = arith.constant 0 : index
    %72 = vector.load %arg7[%71, %c0_37, %c0_38] : memref<8x8x128xf32, #tpu.memory_space<vmem>>, vector<1x8x128xf32>
    %73 = vector.shape_cast %72 : vector<1x8x128xf32> to vector<8x128xf32>
    %74 = vector.shape_cast %70 : vector<8x128xf32> to vector<1x8x128xf32>
    tpu.vector_store %arg7[%71, %c0_37, %c0_38], %74 {strides = array<i32>} : memref<8x8x128xf32, #tpu.memory_space<vmem>>, vector<1x8x128xf32>,
    %c7_i32 = arith.constant 7 : i32
    %75 = arith.index_cast %c7_i32 : i32 to index
    %c0_39 = arith.constant 0 : index
    %c0_40 = arith.constant 0 : index
    %76 = vector.load %arg2[%75, %c0_39, %c0_40] : memref<8x8x128xf32, #tpu.memory_space<vmem>>, vector<1x8x128xf32>
    %77 = vector.shape_cast %76 : vector<1x8x128xf32> to vector<8x128xf32>
    %78 = arith.addf %77, %70 : vector<8x128xf32>
    %cst_41 = arith.constant dense<0.000000e+00> : vector<8x128xf32>
    %79 = tpu.matmul %78, %3, %cst_41 {dimension_numbers = #tpu.dot_dimension_numbers<[1], [0], [0], [1], [0, 0, 1, 1], [], []>} : vector<8x128xf32>, vector<128x128xf32>, vector<8x128xf32> -> vector<8x128xf32>
    %80 = math.tanh %79 : vector<8x128xf32>
    %81 = arith.index_cast %c7_i32 : i32 to index
    %c0_42 = arith.constant 0 : index
    %c0_43 = arith.constant 0 : index
    %82 = vector.load %arg7[%81, %c0_42, %c0_43] : memref<8x8x128xf32, #tpu.memory_space<vmem>>, vector<1x8x128xf32>
    %83 = vector.shape_cast %82 : vector<1x8x128xf32> to vector<8x128xf32>
    %84 = vector.shape_cast %80 : vector<8x128xf32> to vector<1x8x128xf32>
    tpu.vector_store %arg7[%81, %c0_42, %c0_43], %84 {strides = array<i32>} : memref<8x8x128xf32, #tpu.memory_space<vmem>>, vector<1x8x128xf32>,
    %c8_i32 = arith.constant 8 : i32
    %c0_44 = arith.constant 0 : index
    %c0_45 = arith.constant 0 : index
    %85 = vector.load %arg8[%c0_44, %c0_45] : memref<8x128xf32, #tpu.memory_space<vmem>>, vector<8x128xf32>
    tpu.vector_store %arg8[%c0_44, %c0_45], %80 {strides = array<i32>} : memref<8x128xf32, #tpu.memory_space<vmem>>, vector<8x128xf32>,
    %c0_46 = arith.constant 0 : index
    %c0_47 = arith.constant 0 : index
    %86 = vector.load %arg5[%c0_46, %c0_47] : memref<128x128xf32, #tpu.memory_space<vmem>>, vector<128x128xf32>
    %c0_48 = arith.constant 0 : index
    %c0_49 = arith.constant 0 : index
    %87 = vector.load %arg6[%c0_48, %c0_49] : memref<1x128xf32, #tpu.memory_space<vmem>>, vector<1x128xf32>
    %88 = vector.shape_cast %87 : vector<1x128xf32> to vector<1x128xf32>
    %89 = vector.broadcast %88 : vector<1x128xf32> to vector<64x128xf32>
    %90 = tpu.iota {dimensions = array<i32: 1>} : vector<64x128xi32>
    %c20_i32 = arith.constant 20 : i32
    %91 = vector.broadcast %c20_i32 : i32 to vector<64x128xi32>
    %92 = arith.cmpi sge, %90, %91 : vector<64x128xi32>
    %c26_i32 = arith.constant 26 : i32
    %93 = vector.broadcast %c26_i32 : i32 to vector<64x128xi32>
    %94 = arith.cmpi slt, %90, %93 : vector<64x128xi32>
    %95 = arith.andi %92, %94 : vector<64x128xi1>
    %c26_i32_50 = arith.constant 26 : i32
    %96 = vector.broadcast %c26_i32_50 : i32 to vector<64x128xi32>
    %97 = arith.cmpi sge, %90, %96 : vector<64x128xi32>
    %c28_i32 = arith.constant 28 : i32
    %98 = vector.broadcast %c28_i32 : i32 to vector<64x128xi32>
    %99 = arith.cmpi slt, %90, %98 : vector<64x128xi32>
    %100 = arith.andi %97, %99 : vector<64x128xi1>
    %101 = arith.ori %95, %100 : vector<64x128xi1>
    %c0_i32_51 = arith.constant 0 : i32
    %c1_i32_52 = arith.constant 1 : i32
    %102 = arith.muli %c0_i32_51, %c1_i32_52 : i32
    %c0_i32_53 = arith.constant 0 : i32
    %103 = arith.addi %c0_i32_53, %102 : i32
    %c8_i32_54 = arith.constant 8 : i32
    %104 = arith.muli %103, %c8_i32_54 : i32
    %105 = tpu.assume_multiple %104, 8 : i32
    %106 = arith.index_cast %105 : i32 to index
    %c0_55 = arith.constant 0 : index
    %c0_56 = arith.constant 0 : index
    %107 = vector.load %arg7[%106, %c0_55, %c0_56] : memref<8x8x128xf32, #tpu.memory_space<vmem>>, vector<8x8x128xf32>
    %108 = vector.shape_cast %107 : vector<8x8x128xf32> to vector<64x128xf32>
    %cst_57 = arith.constant dense<0.000000e+00> : vector<64x128xf32>
    %109 = tpu.matmul %108, %86, %cst_57 {dimension_numbers = #tpu.dot_dimension_numbers<[1], [0], [0], [1], [0, 0, 1, 1], [], []>} : vector<64x128xf32>, vector<128x128xf32>, vector<64x128xf32> -> vector<64x128xf32>
    %110 = arith.addf %109, %89 : vector<64x128xf32>
    %cst_58 = arith.constant 0.000000e+00 : f32
    %111 = vector.broadcast %cst_58 : f32 to vector<64x128xf32>
    %112 = arith.maximumf %110, %111 : vector<64x128xf32>
    %113 = arith.select %100, %112, %110 : vector<64x128xi1>, vector<64x128xf32>
    %cst_59 = arith.constant 0xFF800000 : f32
    %114 = vector.broadcast %cst_59 : f32 to vector<64x128xf32>
    %115 = arith.select %95, %113, %114 : vector<64x128xi1>, vector<64x128xf32>
    %cst_60 = arith.constant dense<0xFF800000> : vector<64xf32>
    %116 = vector.multi_reduction <maximumf>, %115, %cst_60 [1] : vector<64x128xf32> to vector<64xf32>
    %117 = vector.shape_cast %116 : vector<64xf32> to vector<64x1xf32>
    %cst_61 = arith.constant 0xFF800000 : f32
    %118 = vector.broadcast %cst_61 : f32 to vector<64x128xf32>
    %119 = arith.select %100, %113, %118 : vector<64x128xi1>, vector<64x128xf32>
    %cst_62 = arith.constant dense<0xFF800000> : vector<64xf32>
    %120 = vector.multi_reduction <maximumf>, %119, %cst_62 [1] : vector<64x128xf32> to vector<64xf32>
    %121 = vector.shape_cast %120 : vector<64xf32> to vector<64x1xf32>
    %122 = vector.shape_cast %117 : vector<64x1xf32> to vector<64x1xf32>
    %123 = vector.broadcast %122 : vector<64x1xf32> to vector<64x128xf32>
    %124 = vector.shape_cast %121 : vector<64x1xf32> to vector<64x1xf32>
    %125 = vector.broadcast %124 : vector<64x1xf32> to vector<64x128xf32>
    %126 = arith.select %95, %123, %125 : vector<64x128xi1>, vector<64x128xf32>
    %127 = arith.subf %113, %126 : vector<64x128xf32>
    %128 = math.exp %127 : vector<64x128xf32>
    %cst_63 = arith.constant 0.000000e+00 : f32
    %129 = vector.broadcast %cst_63 : f32 to vector<64x128xf32>
    %130 = arith.select %101, %128, %129 : vector<64x128xi1>, vector<64x128xf32>
    %cst_64 = arith.constant 0.000000e+00 : f32
    %131 = vector.broadcast %cst_64 : f32 to vector<64x128xf32>
    %132 = arith.select %95, %130, %131 : vector<64x128xi1>, vector<64x128xf32>
    %cst_65 = arith.constant dense<0.000000e+00> : vector<64xf32>
    %133 = vector.multi_reduction <add>, %132, %cst_65 [1] : vector<64x128xf32> to vector<64xf32>
    %134 = vector.shape_cast %133 : vector<64xf32> to vector<64x1xf32>
    %cst_66 = arith.constant dense<0.000000e+00> : vector<64xf32>
    %135 = vector.multi_reduction <add>, %130, %cst_66 [1] : vector<64x128xf32> to vector<64xf32>
    %136 = vector.shape_cast %135 : vector<64xf32> to vector<64x1xf32>
    %137 = arith.subf %136, %134 : vector<64x1xf32>
    %138 = vector.shape_cast %134 : vector<64x1xf32> to vector<64x1xf32>
    %139 = vector.broadcast %138 : vector<64x1xf32> to vector<64x128xf32>
    %140 = vector.shape_cast %137 : vector<64x1xf32> to vector<64x1xf32>
    %141 = vector.broadcast %140 : vector<64x1xf32> to vector<64x128xf32>
    %142 = arith.select %95, %139, %141 : vector<64x128xi1>, vector<64x128xf32>
    %143 = arith.divf %130, %142 : vector<64x128xf32>
    %144 = arith.addf %108, %143 : vector<64x128xf32>
    %145 = vector.shape_cast %144 : vector<64x128xf32> to vector<8x8x128xf32>
    %146 = arith.index_cast %105 : i32 to index
    %c0_67 = arith.constant 0 : index
    %c0_68 = arith.constant 0 : index
    %147 = vector.load %arg7[%146, %c0_67, %c0_68] : memref<8x8x128xf32, #tpu.memory_space<vmem>>, vector<8x8x128xf32>
    tpu.vector_store %arg7[%146, %c0_67, %c0_68], %145 {strides = array<i32>} : memref<8x8x128xf32, #tpu.memory_space<vmem>>, vector<8x8x128xf32>,
    %c1_i32_69 = arith.constant 1 : i32
    return
  }
  func.func @transform_0(%arg0: i32, %arg1: i32) -> (i32, i32, i32) {
    %c0_i32 = arith.constant 0 : i32
    %c0_i32_0 = arith.constant 0 : i32
    return %arg1, %arg0, %c0_i32 : i32, i32, i32
  }
  func.func @transform_1(%arg0: i32, %arg1: i32) -> (i32, i32) {
    %c0_i32 = arith.constant 0 : i32
    %c0_i32_0 = arith.constant 0 : i32
    return %arg0, %c0_i32 : i32, i32
  }
  func.func @transform_2(%arg0: i32, %arg1: i32) -> (i32, i32) {
    %c0_i32 = arith.constant 0 : i32
    %c0_i32_0 = arith.constant 0 : i32
    %c0_i32_1 = arith.constant 0 : i32
    return %c0_i32, %c0_i32_0 : i32, i32
  }
  func.func @transform_3(%arg0: i32, %arg1: i32) -> (i32, i32) {
    %c0_i32 = arith.constant 0 : i32
    %c0_i32_0 = arith.constant 0 : i32
    %c0_i32_1 = arith.constant 0 : i32
    return %c0_i32, %c0_i32_0 : i32, i32
  }
  func.func @transform_4(%arg0: i32, %arg1: i32) -> (i32, i32) {
    %c0_i32 = arith.constant 0 : i32
    %c0_i32_0 = arith.constant 0 : i32
    %c0_i32_1 = arith.constant 0 : i32
    return %c0_i32, %c0_i32_0 : i32, i32
  }
  func.func @transform_5(%arg0: i32, %arg1: i32) -> (i32, i32, i32) {
    %c0_i32 = arith.constant 0 : i32
    %c0_i32_0 = arith.constant 0 : i32
    return %arg1, %arg0, %c0_i32 : i32, i32, i32
  }
}

</mosaic_0001>

<llo_original>
// kernel: rnn_mtl_rollout.1
$region0: #{rnn_mtl_rollout.1}
  #allocation0 [shape = 'u32[]', space=smem, size = 0x4, offset = 0x4, fixed_abs, tag = 'smem constant byte address 0x4 - core index']
  #allocation1 [shape = 'u32[72,128]{1,0:T(1,128)}', space=vmem, size = 0x9000, scoped, tag = 'internal scratch']
  #allocation2 [shape = 'f32[8,128]{1,0:T(8,128)}', space=vmem, size = 0x1000, scoped, tag = 'scratch operand']
  %s0 = inlined_call_operand.vmem [shape: f32[8,8,128], index: 0, kind: input, shape index: {}]
  %s1 = inlined_call_operand.vmem [shape: f32[8,128], index: 1, kind: input, shape index: {}]
  %s2 = inlined_call_operand.vmem [shape: f32[128,128], index: 2, kind: input, shape index: {}]
  %s3 = inlined_call_operand.vmem [shape: f32[128,128], index: 3, kind: input, shape index: {}]
  %s4 = inlined_call_operand.vmem [shape: f32[1,128], index: 4, kind: input, shape index: {}]
  %s5 = inlined_call_operand.vmem [shape: f32[8,8,128], index: 5, kind: output, shape index: {}]
  %s6 = sld [smem:[#allocation0]]
  $region34: #{rnn_mtl_rollout.1} parent=0
    _
  %s8 = ssub.s32 1, %s6
  %s9 = scalar_select 0, %s8, %s6
  // Predicated region
  $region2: #{rnn_mtl_rollout.1} parent=0 // pred_check
    _
  $region3: #{rnn_mtl_rollout.1} parent=0 // pred_check_branch
    %11 = sbr.rel (0) target = $region5
  $region4: #{rnn_mtl_rollout.1} parent=0 // pred_region
    _
  $region5: #{rnn_mtl_rollout.1} parent=0 // pred_fallthru
    _
  // Predicated region
  $region6: #{rnn_mtl_rollout.1} parent=0 // pred_check
    _
  $region7: #{rnn_mtl_rollout.1} parent=0 // pred_check_branch
    %13 = sbr.rel (0) target = $region9
  $region8: #{rnn_mtl_rollout.1} parent=0 // pred_region
    _
  $region9: #{rnn_mtl_rollout.1} parent=0 // pred_fallthru
    _
  // Predicated region
  $region10: #{rnn_mtl_rollout.1} parent=0 // pred_check
    _
  $region11: #{rnn_mtl_rollout.1} parent=0 // pred_check_branch
    %15 = sbr.rel (0) target = $region13
  $region12: #{rnn_mtl_rollout.1} parent=0 // pred_region
    _
  $region13: #{rnn_mtl_rollout.1} parent=0 // pred_fallthru
    _
  // Predicated region
  $region14: #{rnn_mtl_rollout.1} parent=0 // pred_check
    _
  $region15: #{rnn_mtl_rollout.1} parent=0 // pred_check_branch
    %17 = sbr.rel (0) target = $region17
  $region16: #{rnn_mtl_rollout.1} parent=0 // pred_region
    _
  $region17: #{rnn_mtl_rollout.1} parent=0 // pred_fallthru
    _
  // Predicated region
  $region18: #{rnn_mtl_rollout.1} parent=0 // pred_check
    _
  $region19: #{rnn_mtl_rollout.1} parent=0 // pred_check_branch
    %19 = sbr.rel (0) target = $region21
  $region20: #{rnn_mtl_rollout.1} parent=0 // pred_region
    _
  $region21: #{rnn_mtl_rollout.1} parent=0 // pred_fallthru
    _
  %p20 = scmp.eq.s32.totalorder 0, 0
  // Predicated region
  $region22: #{rnn_mtl_rollout.1} parent=0 // pred_check
    %p21 = pneg %p20
  $region23: #{rnn_mtl_rollout.1} parent=0 // pred_check_branch
    %23 = sbr.rel (%p21) target = $region25
  $region24: #{rnn_mtl_rollout.1} parent=0 // pred_region
    %v24 = vld [vmem:[%s1] sm:$0xff]
    %25 = vst [vmem:[#allocation2] sm:$0xff] %v24
  $region25: #{rnn_mtl_rollout.1} parent=0 // pred_fallthru
    _
  %v26 = vld [vmem:[%s2] sm:$0xff]
  %v27 = vld [vmem:[%s2 + $0x8] sm:$0xff]
  %v28 = vld [vmem:[%s2 + $0x10] sm:$0xff]
  %v29 = vld [vmem:[%s2 + $0x18] sm:$0xff]
  %v30 = vld [vmem:[%s2 + $0x20] sm:$0xff]
  %v31 = vld [vmem:[%s2 + $0x28] sm:$0xff]
  %v32 = vld [vmem:[%s2 + $0x30] sm:$0xff]
  %v33 = vld [vmem:[%s2 + $0x38] sm:$0xff]
  %v34 = vld [vmem:[%s2 + $0x40] sm:$0xff]
  %v35 = vld [vmem:[%s2 + $0x48] sm:$0xff]
  %v36 = vld [vmem:[%s2 + $0x50] sm:$0xff]
  %v37 = vld [vmem:[%s2 + $0x58] sm:$0xff]
  %v38 = vld [vmem:[%s2 + $0x60] sm:$0xff]
  %v39 = vld [vmem:[%s2 + $0x68] sm:$0xff]
  %v40 = vld [vmem:[%s2 + $0x70] sm:$0xff]
  %v41 = vld [vmem:[%s2 + $0x78] sm:$0xff]
  %v42 = vld [vmem:[#allocation2] sm:$0xff]
  %v43 = vld [vmem:[%s0] sm:$0xff]
  %v44 = vadd.f32 %v43, %v42
  %45 = vmatpush.msra.mxu0 %v41
  %46 = vmatpush.msra.mxu0 %v40
  %47 = vmatpush.msra.mxu0 %v39
  %48 = vmatpush.msra.mxu0 %v38
  %49 = vmatpush.msra.mxu0 %v37
  %50 = vmatpush.msra.mxu0 %v36
  %51 = vmatpush.msra.mxu0 %v35
  %52 = vmatpush.msra.mxu0 %v34
  %53 = vmatpush.msra.mxu0 %v33
  %54 = vmatpush.msra.mxu0 %v32
  %55 = vmatpush.msra.mxu0 %v31
  %56 = vmatpush.msra.mxu0 %v30
  %57 = vmatpush.msra.mxu0 %v29
  %58 = vmatpush.msra.mxu0 %v28
  %59 = vmatpush.msra.mxu0 %v27
  %60 = vmatpush.msra.mxu0 %v26
  %61 = vmatmul.f32.gmra.mxu0 %v44
  %v62 = vpop.f32.mrf.mxu0
  %v63 = vadd.f32 0.0, %v62
  %64 = vdwg.mxu0
  %v65 = vtanh.pop %v63
  %66 = vst [vmem:[%s5] sm:$0xff] %v65
  %s67 = scalar_lea.vmem %s0, 8
  %v68 = vld [vmem:[%s67] sm:$0xff]
  %v69 = vadd.f32 %v68, %v65
  %70 = vmatpush.msra.mxu0 %v41
  %71 = vmatpush.msra.mxu0 %v40
  %72 = vmatpush.msra.mxu0 %v39
  %73 = vmatpush.msra.mxu0 %v38
  %74 = vmatpush.msra.mxu0 %v37
  %75 = vmatpush.msra.mxu0 %v36
  %76 = vmatpush.msra.mxu0 %v35
  %77 = vmatpush.msra.mxu0 %v34
  %78 = vmatpush.msra.mxu0 %v33
  %79 = vmatpush.msra.mxu0 %v32
  %80 = vmatpush.msra.mxu0 %v31
  %81 = vmatpush.msra.mxu0 %v30
  %82 = vmatpush.msra.mxu0 %v29
  %83 = vmatpush.msra.mxu0 %v28
  %84 = vmatpush.msra.mxu0 %v27
  %85 = vmatpush.msra.mxu0 %v26
  %86 = vmatmul.f32.gmra.mxu0 %v69
  %v87 = vpop.f32.mrf.mxu0
  %v88 = vadd.f32 0.0, %v87
  %89 = vdwg.mxu0
  %v90 = vtanh.pop %v88
  %s91 = scalar_lea.vmem %s5, 8
  %92 = vst [vmem:[%s91] sm:$0xff] %v90
  %s93 = scalar_lea.vmem %s0, 16
  %v94 = vld [vmem:[%s93] sm:$0xff]
  %v95 = vadd.f32 %v94, %v90
  %96 = vmatpush.msra.mxu0 %v41
  %97 = vmatpush.msra.mxu0 %v40
  %98 = vmatpush.msra.mxu0 %v39
  %99 = vmatpush.msra.mxu0 %v38
  %100 = vmatpush.msra.mxu0 %v37
  %101 = vmatpush.msra.mxu0 %v36
  %102 = vmatpush.msra.mxu0 %v35
  %103 = vmatpush.msra.mxu0 %v34
  %104 = vmatpush.msra.mxu0 %v33
  %105 = vmatpush.msra.mxu0 %v32
  %106 = vmatpush.msra.mxu0 %v31
  %107 = vmatpush.msra.mxu0 %v30
  %108 = vmatpush.msra.mxu0 %v29
  %109 = vmatpush.msra.mxu0 %v28
  %110 = vmatpush.msra.mxu0 %v27
  %111 = vmatpush.msra.mxu0 %v26
  %112 = vmatmul.f32.gmra.mxu0 %v95
  %v113 = vpop.f32.mrf.mxu0
  %v114 = vadd.f32 0.0, %v113
  %115 = vdwg.mxu0
  %v116 = vtanh.pop %v114
  %s117 = scalar_lea.vmem %s5, 16
  %118 = vst [vmem:[%s117] sm:$0xff] %v116
  %s119 = scalar_lea.vmem %s0, 24
  %v120 = vld [vmem:[%s119] sm:$0xff]
  %v121 = vadd.f32 %v120, %v116
  %122 = vmatpush.msra.mxu0 %v41
  %123 = vmatpush.msra.mxu0 %v40
  %124 = vmatpush.msra.mxu0 %v39
  %125 = vmatpush.msra.mxu0 %v38
  %126 = vmatpush.msra.mxu0 %v37
  %127 = vmatpush.msra.mxu0 %v36
  %128 = vmatpush.msra.mxu0 %v35
  %129 = vmatpush.msra.mxu0 %v34
  %130 = vmatpush.msra.mxu0 %v33
  %131 = vmatpush.msra.mxu0 %v32
  %132 = vmatpush.msra.mxu0 %v31
  %133 = vmatpush.msra.mxu0 %v30
  %134 = vmatpush.msra.mxu0 %v29
  %135 = vmatpush.msra.mxu0 %v28
  %136 = vmatpush.msra.mxu0 %v27
  %137 = vmatpush.msra.mxu0 %v26
  %138 = vmatmul.f32.gmra.mxu0 %v121
  %v139 = vpop.f32.mrf.mxu0
  %v140 = vadd.f32 0.0, %v139
  %141 = vdwg.mxu0
  %v142 = vtanh.pop %v140
  %s143 = scalar_lea.vmem %s5, 24
  %144 = vst [vmem:[%s143] sm:$0xff] %v142
  %s145 = scalar_lea.vmem %s0, 32
  %v146 = vld [vmem:[%s145] sm:$0xff]
  %v147 = vadd.f32 %v146, %v142
  %148 = vmatpush.msra.mxu0 %v41
  %149 = vmatpush.msra.mxu0 %v40
  %150 = vmatpush.msra.mxu0 %v39
  %151 = vmatpush.msra.mxu0 %v38
  %152 = vmatpush.msra.mxu0 %v37
  %153 = vmatpush.msra.mxu0 %v36
  %154 = vmatpush.msra.mxu0 %v35
  %155 = vmatpush.msra.mxu0 %v34
  %156 = vmatpush.msra.mxu0 %v33
  %157 = vmatpush.msra.mxu0 %v32
  %158 = vmatpush.msra.mxu0 %v31
  %159 = vmatpush.msra.mxu0 %v30
  %160 = vmatpush.msra.mxu0 %v29
  %161 = vmatpush.msra.mxu0 %v28
  %162 = vmatpush.msra.mxu0 %v27
  %163 = vmatpush.msra.mxu0 %v26
  %164 = vmatmul.f32.gmra.mxu0 %v147
  %v165 = vpop.f32.mrf.mxu0
  %v166 = vadd.f32 0.0, %v165
  %167 = vdwg.mxu0
  %v168 = vtanh.pop %v166
  %s169 = scalar_lea.vmem %s5, 32
  %170 = vst [vmem:[%s169] sm:$0xff] %v168
  %s171 = scalar_lea.vmem %s0, 40
  %v172 = vld [vmem:[%s171] sm:$0xff]
  %v173 = vadd.f32 %v172, %v168
  %174 = vmatpush.msra.mxu0 %v41
  %175 = vmatpush.msra.mxu0 %v40
  %176 = vmatpush.msra.mxu0 %v39
  %177 = vmatpush.msra.mxu0 %v38
  %178 = vmatpush.msra.mxu0 %v37
  %179 = vmatpush.msra.mxu0 %v36
  %180 = vmatpush.msra.mxu0 %v35
  %181 = vmatpush.msra.mxu0 %v34
  %182 = vmatpush.msra.mxu0 %v33
  %183 = vmatpush.msra.mxu0 %v32
  %184 = vmatpush.msra.mxu0 %v31
  %185 = vmatpush.msra.mxu0 %v30
  %186 = vmatpush.msra.mxu0 %v29
  %187 = vmatpush.msra.mxu0 %v28
  %188 = vmatpush.msra.mxu0 %v27
  %189 = vmatpush.msra.mxu0 %v26
  %190 = vmatmul.f32.gmra.mxu0 %v173
  %v191 = vpop.f32.mrf.mxu0
  %v192 = vadd.f32 0.0, %v191
  %193 = vdwg.mxu0
  %v194 = vtanh.pop %v192
  %s195 = scalar_lea.vmem %s5, 40
  %196 = vst [vmem:[%s195] sm:$0xff] %v194
  %s197 = scalar_lea.vmem %s0, 48
  %v198 = vld [vmem:[%s197] sm:$0xff]
  %v199 = vadd.f32 %v198, %v194
  %200 = vmatpush.msra.mxu0 %v41
  %201 = vmatpush.msra.mxu0 %v40
  %202 = vmatpush.msra.mxu0 %v39
  %203 = vmatpush.msra.mxu0 %v38
  %204 = vmatpush.msra.mxu0 %v37
  %205 = vmatpush.msra.mxu0 %v36
  %206 = vmatpush.msra.mxu0 %v35
  %207 = vmatpush.msra.mxu0 %v34
  %208 = vmatpush.msra.mxu0 %v33
  %209 = vmatpush.msra.mxu0 %v32
  %210 = vmatpush.msra.mxu0 %v31
  %211 = vmatpush.msra.mxu0 %v30
  %212 = vmatpush.msra.mxu0 %v29
  %213 = vmatpush.msra.mxu0 %v28
  %214 = vmatpush.msra.mxu0 %v27
  %215 = vmatpush.msra.mxu0 %v26
  %216 = vmatmul.f32.gmra.mxu0 %v199
  %v217 = vpop.f32.mrf.mxu0
  %v218 = vadd.f32 0.0, %v217
  %219 = vdwg.mxu0
  %v220 = vtanh.pop %v218
  %s221 = scalar_lea.vmem %s5, 48
  %222 = vst [vmem:[%s221] sm:$0xff] %v220
  %s223 = scalar_lea.vmem %s0, 56
  %v224 = vld [vmem:[%s223] sm:$0xff]
  %v225 = vadd.f32 %v224, %v220
  %226 = vmatpush.msra.mxu0 %v41
  %227 = vmatpush.msra.mxu0 %v40
  %228 = vmatpush.msra.mxu0 %v39
  %229 = vmatpush.msra.mxu0 %v38
  %230 = vmatpush.msra.mxu0 %v37
  %231 = vmatpush.msra.mxu0 %v36
  %232 = vmatpush.msra.mxu0 %v35
  %233 = vmatpush.msra.mxu0 %v34
  %234 = vmatpush.msra.mxu0 %v33
  %235 = vmatpush.msra.mxu0 %v32
  %236 = vmatpush.msra.mxu0 %v31
  %237 = vmatpush.msra.mxu0 %v30
  %238 = vmatpush.msra.mxu0 %v29
  %239 = vmatpush.msra.mxu0 %v28
  %240 = vmatpush.msra.mxu0 %v27
  %241 = vmatpush.msra.mxu0 %v26
  %242 = vmatmul.f32.gmra.mxu0 %v225
  %v243 = vpop.f32.mrf.mxu0
  %v244 = vadd.f32 0.0, %v243
  %245 = vdwg.mxu0
  %v246 = vtanh.pop %v244
  %s247 = scalar_lea.vmem %s5, 56
  %248 = vst [vmem:[%s247] sm:$0xff] %v246
  %249 = vst [vmem:[#allocation2] sm:$0xff] %v246
  %v250 = vld [vmem:[%s3] sm:$0xff]
  %v251 = vld [vmem:[%s3 + $0x8] sm:$0xff]
  %v252 = vld [vmem:[%s3 + $0x10] sm:$0xff]
  %v253 = vld [vmem:[%s3 + $0x18] sm:$0xff]
  %v254 = vld [vmem:[%s3 + $0x20] sm:$0xff]
  %v255 = vld [vmem:[%s3 + $0x28] sm:$0xff]
  %v256 = vld [vmem:[%s3 + $0x30] sm:$0xff]
  %v257 = vld [vmem:[%s3 + $0x38] sm:$0xff]
  %v258 = vld [vmem:[%s3 + $0x40] sm:$0xff]
  %v259 = vld [vmem:[%s3 + $0x48] sm:$0xff]
  %v260 = vld [vmem:[%s3 + $0x50] sm:$0xff]
  %v261 = vld [vmem:[%s3 + $0x58] sm:$0xff]
  %v262 = vld [vmem:[%s3 + $0x60] sm:$0xff]
  %v263 = vld [vmem:[%s3 + $0x68] sm:$0xff]
  %v264 = vld [vmem:[%s3 + $0x70] sm:$0xff]
  %v265 = vld [vmem:[%s3 + $0x78] sm:$0xff]
  %v266 = vld [vmem:[%s4] sm:$0x1]
  %v268 = vperm.slane %v266, 0
  %v270 = vlaneseq
  %v271 = vand.u32 %v270, 127
  %vm272 = vcmp.ge.s32.totalorder %v271, 20
  %vm273 = vcmp.lt.s32.totalorder %v271, 26
  %vm274 = vmand %vm272, %vm273
  %vm275 = vcmp.ge.s32.totalorder %v271, 26
  %vm276 = vcmp.lt.s32.totalorder %v271, 28
  %vm277 = vmand %vm275, %vm276
  %vm278 = vmor %vm274, %vm277
  %s279 = smul.u32 0, 8
  %s280 = scalar_lea.vmem %s5, %s279
  %v281 = vld [vmem:[%s280] sm:$0xff]
  %v282 = vld [vmem:[%s280 + $0x8] sm:$0xff]
  %v283 = vld [vmem:[%s280 + $0x10] sm:$0xff]
  %v284 = vld [vmem:[%s280 + $0x18] sm:$0xff]
  %v285 = vld [vmem:[%s280 + $0x20] sm:$0xff]
  %v286 = vld [vmem:[%s280 + $0x28] sm:$0xff]
  %v287 = vld [vmem:[%s280 + $0x30] sm:$0xff]
  %v288 = vld [vmem:[%s280 + $0x38] sm:$0xff]
  %289 = vmatpush.msra.mxu0 %v265
  %290 = vmatpush.msra.mxu0 %v264
  %291 = vmatpush.msra.mxu0 %v263
  %292 = vmatpush.msra.mxu0 %v262
  %293 = vmatpush.msra.mxu0 %v261
  %294 = vmatpush.msra.mxu0 %v260
  %295 = vmatpush.msra.mxu0 %v259
  %296 = vmatpush.msra.mxu0 %v258
  %297 = vmatpush.msra.mxu0 %v257
  %298 = vmatpush.msra.mxu0 %v256
  %299 = vmatpush.msra.mxu0 %v255
  %300 = vmatpush.msra.mxu0 %v254
  %301 = vmatpush.msra.mxu0 %v253
  %302 = vmatpush.msra.mxu0 %v252
  %303 = vmatpush.msra.mxu0 %v251
  %304 = vmatpush.msra.mxu0 %v250
  %305 = vmatmul.f32.gmra.mxu0 %v281
  %v306 = vpop.f32.mrf.mxu0
  %v307 = vadd.f32 %v268, %v306
  %308 = vmatmul.f32.gmra.mxu0 %v282
  %v309 = vpop.f32.mrf.mxu0
  %v310 = vadd.f32 %v268, %v309
  %311 = vmatmul.f32.gmra.mxu0 %v283
  %v312 = vpop.f32.mrf.mxu0
  %v313 = vadd.f32 %v268, %v312
  %314 = vmatmul.f32.gmra.mxu0 %v284
  %v315 = vpop.f32.mrf.mxu0
  %v316 = vadd.f32 %v268, %v315
  %317 = vmatmul.f32.gmra.mxu0 %v285
  %v318 = vpop.f32.mrf.mxu0
  %v319 = vadd.f32 %v268, %v318
  %320 = vmatmul.f32.gmra.mxu0 %v286
  %v321 = vpop.f32.mrf.mxu0
  %v322 = vadd.f32 %v268, %v321
  %323 = vmatmul.f32.gmra.mxu0 %v287
  %v324 = vpop.f32.mrf.mxu0
  %v325 = vadd.f32 %v268, %v324
  %326 = vmatmul.f32.gmra.mxu0 %v288
  %v327 = vpop.f32.mrf.mxu0
  %v328 = vadd.f32 %v268, %v327
  %329 = vdwg.mxu0
  %v330 = vmax.f32 %v307, 0.0
  %v331 = vmax.f32 %v310, 0.0
  %v332 = vmax.f32 %v313, 0.0
  %v333 = vmax.f32 %v316, 0.0
  %v334 = vmax.f32 %v319, 0.0
  %v335 = vmax.f32 %v322, 0.0
  %v336 = vmax.f32 %v325, 0.0
  %v337 = vmax.f32 %v328, 0.0
  %v338 = vsel %vm277, %v330, %v307
  %v339 = vsel %vm277, %v331, %v310
  %v340 = vsel %vm277, %v332, %v313
  %v341 = vsel %vm277, %v333, %v316
  %v342 = vsel %vm277, %v334, %v319
  %v343 = vsel %vm277, %v335, %v322
  %v344 = vsel %vm277, %v336, %v325
  %v345 = vsel %vm277, %v337, %v328
  %v346 = vsel %vm274, %v338, -inf
  %v347 = vsel %vm274, %v339, -inf
  %v348 = vsel %vm274, %v340, -inf
  %v349 = vsel %vm274, %v341, -inf
  %v350 = vsel %vm274, %v342, -inf
  %v351 = vsel %vm274, %v343, -inf
  %v352 = vsel %vm274, %v344, -inf
  %v353 = vsel %vm274, %v345, -inf
  %354 = vmax.xlane.f32.xlu0 %v346
  %v355 = vpop.xlane.xlu0 %354
  %356 = vmax.xlane.f32.xlu0 %v347
  %v357 = vpop.xlane.xlu0 %356
  %358 = vmax.xlane.f32.xlu0 %v348
  %v359 = vpop.xlane.xlu0 %358
  %360 = vmax.xlane.f32.xlu0 %v349
  %v361 = vpop.xlane.xlu0 %360
  %362 = vmax.xlane.f32.xlu0 %v350
  %v363 = vpop.xlane.xlu0 %362
  %364 = vmax.xlane.f32.xlu0 %v351
  %v365 = vpop.xlane.xlu0 %364
  %366 = vmax.xlane.f32.xlu0 %v352
  %v367 = vpop.xlane.xlu0 %366
  %368 = vmax.xlane.f32.xlu0 %v353
  %v369 = vpop.xlane.xlu0 %368
  %v370 = vsel %vm277, %v330, -inf
  %v371 = vsel %vm277, %v331, -inf
  %v372 = vsel %vm277, %v332, -inf
  %v373 = vsel %vm277, %v333, -inf
  %v374 = vsel %vm277, %v334, -inf
  %v375 = vsel %vm277, %v335, -inf
  %v376 = vsel %vm277, %v336, -inf
  %v377 = vsel %vm277, %v337, -inf
  %378 = vmax.xlane.f32.xlu0 %v370
  %v379 = vpop.xlane.xlu0 %378
  %380 = vmax.xlane.f32.xlu0 %v371
  %v381 = vpop.xlane.xlu0 %380
  %382 = vmax.xlane.f32.xlu0 %v372
  %v383 = vpop.xlane.xlu0 %382
  %384 = vmax.xlane.f32.xlu0 %v373
  %v385 = vpop.xlane.xlu0 %384
  %386 = vmax.xlane.f32.xlu0 %v374
  %v387 = vpop.xlane.xlu0 %386
  %388 = vmax.xlane.f32.xlu0 %v375
  %v389 = vpop.xlane.xlu0 %388
  %390 = vmax.xlane.f32.xlu0 %v376
  %v391 = vpop.xlane.xlu0 %390
  %392 = vmax.xlane.f32.xlu0 %v377
  %v393 = vpop.xlane.xlu0 %392
  %v394 = vsel %vm274, %v355, %v379
  %v395 = vsel %vm274, %v357, %v381
  %v396 = vsel %vm274, %v359, %v383
  %v397 = vsel %vm274, %v361, %v385
  %v398 = vsel %vm274, %v363, %v387
  %v399 = vsel %vm274, %v365, %v389
  %v400 = vsel %vm274, %v367, %v391
  %v401 = vsel %vm274, %v369, %v393
  %v402 = vsub.f32 %v338, %v394
  %v403 = vsub.f32 %v339, %v395
  %v404 = vsub.f32 %v340, %v396
  %v405 = vsub.f32 %v341, %v397
  %v406 = vsub.f32 %v342, %v398
  %v407 = vsub.f32 %v343, %v399
  %v408 = vsub.f32 %v344, %v400
  %v409 = vsub.f32 %v345, %v401
  %v410 = vmul.f32 %v402, 1.442695
  %v411 = vpow.pop %v410
  %v412 = vmul.f32 %v403, 1.442695
  %v413 = vpow.pop %v412
  %v414 = vmul.f32 %v404, 1.442695
  %v415 = vpow.pop %v414
  %v416 = vmul.f32 %v405, 1.442695
  %v417 = vpow.pop %v416
  %v418 = vmul.f32 %v406, 1.442695
  %v419 = vpow.pop %v418
  %v420 = vmul.f32 %v407, 1.442695
  %v421 = vpow.pop %v420
  %v422 = vmul.f32 %v408, 1.442695
  %v423 = vpow.pop %v422
  %v424 = vmul.f32 %v409, 1.442695
  %v425 = vpow.pop %v424
  %v426 = vsel %vm278, %v411, 0.0
  %v427 = vsel %vm278, %v413, 0.0
  %v428 = vsel %vm278, %v415, 0.0
  %v429 = vsel %vm278, %v417, 0.0
  %v430 = vsel %vm278, %v419, 0.0
  %v431 = vsel %vm278, %v421, 0.0
  %v432 = vsel %vm278, %v423, 0.0
  %v433 = vsel %vm278, %v425, 0.0
  %v434 = vsel %vm274, %v426, 0.0
  %v435 = vsel %vm274, %v427, 0.0
  %v436 = vsel %vm274, %v428, 0.0
  %v437 = vsel %vm274, %v429, 0.0
  %v438 = vsel %vm274, %v430, 0.0
  %v439 = vsel %vm274, %v431, 0.0
  %v440 = vsel %vm274, %v432, 0.0
  %v441 = vsel %vm274, %v433, 0.0
  %442 = vadd.xlane.f32.xlu0 %v434
  %v443 = vpop.xlane.xlu0 %442
  %444 = vadd.xlane.f32.xlu0 %v435
  %v445 = vpop.xlane.xlu0 %444
  %446 = vadd.xlane.f32.xlu0 %v436
  %v447 = vpop.xlane.xlu0 %446
  %448 = vadd.xlane.f32.xlu0 %v437
  %v449 = vpop.xlane.xlu0 %448
  %450 = vadd.xlane.f32.xlu0 %v438
  %v451 = vpop.xlane.xlu0 %450
  %452 = vadd.xlane.f32.xlu0 %v439
  %v453 = vpop.xlane.xlu0 %452
  %454 = vadd.xlane.f32.xlu0 %v440
  %v455 = vpop.xlane.xlu0 %454
  %456 = vadd.xlane.f32.xlu0 %v441
  %v457 = vpop.xlane.xlu0 %456
  %458 = vadd.xlane.f32.xlu0 %v426
  %v459 = vpop.xlane.xlu0 %458
  %460 = vadd.xlane.f32.xlu0 %v427
  %v461 = vpop.xlane.xlu0 %460
  %462 = vadd.xlane.f32.xlu0 %v428
  %v463 = vpop.xlane.xlu0 %462
  %464 = vadd.xlane.f32.xlu0 %v429
  %v465 = vpop.xlane.xlu0 %464
  %466 = vadd.xlane.f32.xlu0 %v430
  %v467 = vpop.xlane.xlu0 %466
  %468 = vadd.xlane.f32.xlu0 %v431
  %v469 = vpop.xlane.xlu0 %468
  %470 = vadd.xlane.f32.xlu0 %v432
  %v471 = vpop.xlane.xlu0 %470
  %472 = vadd.xlane.f32.xlu0 %v433
  %v473 = vpop.xlane.xlu0 %472
  %v474 = vsub.f32 %v459, %v443
  %v475 = vsub.f32 %v461, %v445
  %v476 = vsub.f32 %v463, %v447
  %v477 = vsub.f32 %v465, %v449
  %v478 = vsub.f32 %v467, %v451
  %v479 = vsub.f32 %v469, %v453
  %v480 = vsub.f32 %v471, %v455
  %v481 = vsub.f32 %v473, %v457
  %v482 = vsel %vm274, %v443, %v474
  %v483 = vsel %vm274, %v445, %v475
  %v484 = vsel %vm274, %v447, %v476
  %v485 = vsel %vm274, %v449, %v477
  %v486 = vsel %vm274, %v451, %v478
  %v487 = vsel %vm274, %v453, %v479
  %v488 = vsel %vm274, %v455, %v480
  %v489 = vsel %vm274, %v457, %v481
  %v490 = vrcp.pop %v482
  %v491 = vmul.f32 %v482, %v490
  %v492 = vsub.f32 1.0, %v491
  %v493 = vmul.f32 %v490, %v492
  %v494 = vadd.f32 %v490, %v493
  %vm495 = vweird.f32 %v482
  %vm496 = vweird.f32 %v490
  %vm497 = vmor %vm495, %vm496
  %v498 = vsel %vm497, %v490, %v494
  %v499 = vand.u32 2147483647, %v482
  %vm500 = vcmp.eq.f32.partialorder %v499, 8.507059e+37
  %v501 = vand.u32 %v482, 2147483648
  %v502 = vor.u32 1.1754944e-38, %v501
  %v503 = vsel %vm500, %v502, %v498
  %v504 = vmul.f32 %v426, %v503
  %v505 = vrcp.pop %v483
  %v506 = vmul.f32 %v483, %v505
  %v507 = vsub.f32 1.0, %v506
  %v508 = vmul.f32 %v505, %v507
  %v509 = vadd.f32 %v505, %v508
  %vm510 = vweird.f32 %v483
  %vm511 = vweird.f32 %v505
  %vm512 = vmor %vm510, %vm511
  %v513 = vsel %vm512, %v505, %v509
  %v514 = vand.u32 2147483647, %v483
  %vm515 = vcmp.eq.f32.partialorder %v514, 8.507059e+37
  %v516 = vand.u32 %v483, 2147483648
  %v517 = vor.u32 1.1754944e-38, %v516
  %v518 = vsel %vm515, %v517, %v513
  %v519 = vmul.f32 %v427, %v518
  %v520 = vrcp.pop %v484
  %v521 = vmul.f32 %v484, %v520
  %v522 = vsub.f32 1.0, %v521
  %v523 = vmul.f32 %v520, %v522
  %v524 = vadd.f32 %v520, %v523
  %vm525 = vweird.f32 %v484
  %vm526 = vweird.f32 %v520
  %vm527 = vmor %vm525, %vm526
  %v528 = vsel %vm527, %v520, %v524
  %v529 = vand.u32 2147483647, %v484
  %vm530 = vcmp.eq.f32.partialorder %v529, 8.507059e+37
  %v531 = vand.u32 %v484, 2147483648
  %v532 = vor.u32 1.1754944e-38, %v531
  %v533 = vsel %vm530, %v532, %v528
  %v534 = vmul.f32 %v428, %v533
  %v535 = vrcp.pop %v485
  %v536 = vmul.f32 %v485, %v535
  %v537 = vsub.f32 1.0, %v536
  %v538 = vmul.f32 %v535, %v537
  %v539 = vadd.f32 %v535, %v538
  %vm540 = vweird.f32 %v485
  %vm541 = vweird.f32 %v535
  %vm542 = vmor %vm540, %vm541
  %v543 = vsel %vm542, %v535, %v539
  %v544 = vand.u32 2147483647, %v485
  %vm545 = vcmp.eq.f32.partialorder %v544, 8.507059e+37
  %v546 = vand.u32 %v485, 2147483648
  %v547 = vor.u32 1.1754944e-38, %v546
  %v548 = vsel %vm545, %v547, %v543
  %v549 = vmul.f32 %v429, %v548
  %v550 = vrcp.pop %v486
  %v551 = vmul.f32 %v486, %v550
  %v552 = vsub.f32 1.0, %v551
  %v553 = vmul.f32 %v550, %v552
  %v554 = vadd.f32 %v550, %v553
  %vm555 = vweird.f32 %v486
  %vm556 = vweird.f32 %v550
  %vm557 = vmor %vm555, %vm556
  %v558 = vsel %vm557, %v550, %v554
  %v559 = vand.u32 2147483647, %v486
  %vm560 = vcmp.eq.f32.partialorder %v559, 8.507059e+37
  %v561 = vand.u32 %v486, 2147483648
  %v562 = vor.u32 1.1754944e-38, %v561
  %v563 = vsel %vm560, %v562, %v558
  %v564 = vmul.f32 %v430, %v563
  %v565 = vrcp.pop %v487
  %v566 = vmul.f32 %v487, %v565
  %v567 = vsub.f32 1.0, %v566
  %v568 = vmul.f32 %v565, %v567
  %v569 = vadd.f32 %v565, %v568
  %vm570 = vweird.f32 %v487
  %vm571 = vweird.f32 %v565
  %vm572 = vmor %vm570, %vm571
  %v573 = vsel %vm572, %v565, %v569
  %v574 = vand.u32 2147483647, %v487
  %vm575 = vcmp.eq.f32.partialorder %v574, 8.507059e+37
  %v576 = vand.u32 %v487, 2147483648
  %v577 = vor.u32 1.1754944e-38, %v576
  %v578 = vsel %vm575, %v577, %v573
  %v579 = vmul.f32 %v431, %v578
  %v580 = vrcp.pop %v488
  %v581 = vmul.f32 %v488, %v580
  %v582 = vsub.f32 1.0, %v581
  %v583 = vmul.f32 %v580, %v582
  %v584 = vadd.f32 %v580, %v583
  %vm585 = vweird.f32 %v488
  %vm586 = vweird.f32 %v580
  %vm587 = vmor %vm585, %vm586
  %v588 = vsel %vm587, %v580, %v584
  %v589 = vand.u32 2147483647, %v488
  %vm590 = vcmp.eq.f32.partialorder %v589, 8.507059e+37
  %v591 = vand.u32 %v488, 2147483648
  %v592 = vor.u32 1.1754944e-38, %v591
  %v593 = vsel %vm590, %v592, %v588
  %v594 = vmul.f32 %v432, %v593
  %v595 = vrcp.pop %v489
  %v596 = vmul.f32 %v489, %v595
  %v597 = vsub.f32 1.0, %v596
  %v598 = vmul.f32 %v595, %v597
  %v599 = vadd.f32 %v595, %v598
  %vm600 = vweird.f32 %v489
  %vm601 = vweird.f32 %v595
  %vm602 = vmor %vm600, %vm601
  %v603 = vsel %vm602, %v595, %v599
  %v604 = vand.u32 2147483647, %v489
  %vm605 = vcmp.eq.f32.partialorder %v604, 8.507059e+37
  %v606 = vand.u32 %v489, 2147483648
  %v607 = vor.u32 1.1754944e-38, %v606
  %v608 = vsel %vm605, %v607, %v603
  %v609 = vmul.f32 %v433, %v608
  %v610 = vadd.f32 %v281, %v504
  %v611 = vadd.f32 %v282, %v519
  %v612 = vadd.f32 %v283, %v534
  %v613 = vadd.f32 %v284, %v549
  %v614 = vadd.f32 %v285, %v564
  %v615 = vadd.f32 %v286, %v579
  %v616 = vadd.f32 %v287, %v594
  %v617 = vadd.f32 %v288, %v609
  %618 = vst [vmem:[%s280] sm:$0xff] %v610
  %619 = vst [vmem:[%s280 + $0x8] sm:$0xff] %v611
  %620 = vst [vmem:[%s280 + $0x10] sm:$0xff] %v612
  %621 = vst [vmem:[%s280 + $0x18] sm:$0xff] %v613
  %622 = vst [vmem:[%s280 + $0x20] sm:$0xff] %v614
  %623 = vst [vmem:[%s280 + $0x28] sm:$0xff] %v615
  %624 = vst [vmem:[%s280 + $0x30] sm:$0xff] %v616
  %625 = vst [vmem:[%s280 + $0x38] sm:$0xff] %v617
  // Predicated region
  $region26: #{rnn_mtl_rollout.1} parent=0 // pred_check
    _
  $region27: #{rnn_mtl_rollout.1} parent=0 // pred_check_branch
    %627 = sbr.rel (0) target = $region29
  $region28: #{rnn_mtl_rollout.1} parent=0 // pred_region
    _
  $region29: #{rnn_mtl_rollout.1} parent=0 // pred_fallthru
    _
  // Predicated region
  $region30: #{rnn_mtl_rollout.1} parent=0 // pred_check
    _
  $region31: #{rnn_mtl_rollout.1} parent=0 // pred_check_branch
    %629 = sbr.rel (0) target = $region33
  $region32: #{rnn_mtl_rollout.1} parent=0 // pred_region
    _
  $region33: #{rnn_mtl_rollout.1} parent=0 // pred_fallthru
    _

</llo_original>
